<compile_context>
chip_gen: v6e
topology: v6e:2x2x1
jax: 0.10.0
libtpu: 0.0.40
codegen_flags: <defaults>
</compile_context>

<pallas_src>
import functools

import jax
import jax.numpy as jnp
from jax import lax
from jax.experimental import pallas as pl
from jax.experimental.pallas import tpu as pltpu


_NEG = -1e30    # "minus infinity": exp() underflows cleanly to 0 (Python float)
_EPS2 = 1e-24   # (F.normalize eps=1e-12)**2, applied to squared norms


def _cosface_kernel(x_ref, wt_ref, lab_ref, loss_ref,
                    xn_ref, m_ref, l_ref, t_ref,
                    *, s, m, num_classes, batch):
    b = pl.program_id(0)
    c = pl.program_id(1)
    n_c = pl.num_programs(1)

    tb = xn_ref.shape[0]
    tc = wt_ref.shape[1]

    # --- per-B-tile init: normalize x once (hoisted out of the C loop) ---------
    @pl.when(c == 0)
    def _init():
        xf = x_ref[...]                                              # (TB, D) f32
        inv = lax.rsqrt(jnp.maximum(jnp.sum(xf * xf, axis=1, keepdims=True), _EPS2))
        xn_ref[...] = (xf * inv).astype(jnp.bfloat16)                # bf16 for the MXU
        m_ref[...] = jnp.full_like(m_ref, _NEG)
        l_ref[...] = jnp.zeros_like(l_ref)
        t_ref[...] = jnp.zeros_like(t_ref)

    # --- normalize streamed weight tile, columns = classes: (D, TC) ------------
    wt = wt_ref[...]                                                 # (D, TC) f32
    inv_w = lax.rsqrt(jnp.maximum(jnp.sum(wt * wt, axis=0, keepdims=True), _EPS2))
    w_n = (wt * inv_w).astype(jnp.bfloat16)                          # (D, TC) bf16

    # cosine tile: (TB, D) @ (D, TC) on the MXU, f32 accumulation
    cosine = jnp.dot(xn_ref[...], w_n, preferred_element_type=jnp.float32)

    # --- CosFace margin via masks (no materialized one-hot) --------------------
    class_ids = c * tc + lax.broadcasted_iota(jnp.int32, (tb, tc), 1)
    labels = lab_ref[...]                                            # (TB, 1) int32
    is_true = class_ids == labels
    in_range = class_ids < num_classes                               # drop padded classes

    logits = s * cosine
    logits = jnp.where(is_true, logits - (s * m), logits)
    logits = jnp.where(in_range, logits, _NEG)

    # --- online softmax accumulation over C tiles -------------------------------
    tile_max = jnp.max(logits, axis=1, keepdims=True)
    m_new = jnp.maximum(m_ref[...], tile_max)
    alpha = jnp.exp(m_ref[...] - m_new)
    p_sum = jnp.sum(jnp.exp(logits - m_new), axis=1, keepdims=True)
    l_ref[...] = alpha * l_ref[...] + p_sum
    m_ref[...] = m_new
    # the true logit is a raw value (not part of the softmax recursion -> no rescale)
    t_ref[...] = t_ref[...] + jnp.sum(jnp.where(is_true, logits, 0.0),
                                      axis=1, keepdims=True)

    # --- finalize: per-row loss for this B tile ---------------------------------
    @pl.when(c == n_c - 1)
    def _finalize():
        row_ids = b * tb + lax.broadcasted_iota(jnp.int32, (tb, 1), 0)
        row_valid = row_ids < batch                                  # mask padded rows
        per_row = m_ref[...] + jnp.log(l_ref[...]) - t_ref[...]      # lse - true_logit
        loss_ref[...] = jnp.where(row_valid, per_row, 0.0)


def _round_up(a, b):
    return (a + b - 1) // b * b


def cosface_loss(x, weight, label, *, s=64.0, m=0.35, tb=128, tc=512):
    """Pallas implementation of CosFaceLoss.forward.

    x:      (B, ...) float32 -> flattened to (B, D) like input.view(B, -1)
    weight: (C, D)   float32 (out_features x in_features, like nn.Linear)
    label:  (B,)     int32
    returns scalar float32 loss
    """
    B = x.shape[0]
    x2d = x.reshape(B, -1).astype(jnp.float32)
    C, D = weight.shape
    assert x2d.shape[1] == D, "flattened input features must match in_features"

    TB = min(tb, _round_up(B, 8))
    TC = min(tc, _round_up(C, 128))
    B_pad = _round_up(B, TB)
    C_pad = _round_up(C, TC)
    D_pad = _round_up(D, 128)
    nB = B_pad // TB
    nC = C_pad // TC

    # Zero-padding is semantics-neutral: padded D contributes nothing to norms or
    # dots; padded classes/rows are masked out inside the kernel.
    x_p = jnp.zeros((B_pad, D_pad), jnp.float32).at[:B, :D].set(x2d)
    # One-time host-side transpose: feed the MXU its preferred (K, N) layout.
    w_t = jnp.zeros((D_pad, C_pad), jnp.float32).at[:D, :C].set(
        weight.astype(jnp.float32).T)
    lab_p = jnp.zeros((B_pad, 1), jnp.int32).at[:B, 0].set(label.astype(jnp.int32))

    kernel = functools.partial(_cosface_kernel, s=float(s), m=float(m),
                               num_classes=C, batch=B)

    grid_spec = pltpu.PrefetchScalarGridSpec(
        num_scalar_prefetch=0,
        grid=(nB, nC),
        in_specs=[
            pl.BlockSpec((TB, D_pad), lambda b, c: (b, 0)),   # x      (resident over C)
            pl.BlockSpec((D_pad, TC), lambda b, c: (0, c)),   # weight (streamed over C)
            pl.BlockSpec((TB, 1), lambda b, c: (b, 0)),       # labels
        ],
        out_specs=pl.BlockSpec((TB, 1), lambda b, c: (b, 0)),  # per-row loss
        scratch_shapes=[
            pltpu.VMEM((TB, D_pad), jnp.bfloat16),  # normalized x (reused per C tile)
            pltpu.VMEM((TB, 1), jnp.float32),       # running row max
            pltpu.VMEM((TB, 1), jnp.float32),       # running exp sum
            pltpu.VMEM((TB, 1), jnp.float32),       # true logit
        ],
    )

    per_row_losses = pl.pallas_call(
        kernel,
        out_shape=jax.ShapeDtypeStruct((B_pad, 1), jnp.float32),
        grid_spec=grid_spec,
        compiler_params=pltpu.CompilerParams(
            dimension_semantics=("parallel", "arbitrary")),
        cost_estimate=pl.CostEstimate(
            flops=2 * B_pad * C_pad * D_pad,
            transcendentals=B_pad * C_pad,
            bytes_accessed=(x_p.size + w_t.size * nB + lab_p.size + B_pad) * 4),
    )(x_p, w_t, lab_p)

    # Tiny final reduction/mean in the wrapper (padded rows are already zeroed).
    return jnp.sum(per_row_losses) / jnp.float32(B)


def cosface_loss_ref(x, weight, label, *, s=64.0, m=0.35):
    """Pure-JAX reference mirroring the PyTorch module (f32 throughout)."""
    B = x.shape[0]
    x2d = x.reshape(B, -1)
    eps = 1e-12
    x_n = x2d / jnp.maximum(jnp.linalg.norm(x2d, axis=1, keepdims=True), eps)
    w_n = weight / jnp.maximum(jnp.linalg.norm(weight, axis=1, keepdims=True), eps)
    cosine = x_n @ w_n.T
    one_hot = jax.nn.one_hot(label, weight.shape[0], dtype=jnp.float32)
    logits = s * (cosine - one_hot * m)
    logp = jax.nn.log_softmax(logits, axis=1)
    return -jnp.mean(jnp.sum(one_hot * logp, axis=1))


if __name__ == "__main__":
    # Small deterministic problem that still exercises a real multi-tile grid:
    # B=12 (padded to 16 -> 2 B-tiles of 8), C=300 (padded to 384 -> 3 C-tiles of
    # 128), D=48 (padded to 128).
    B, in_features, out_features = 12, 48, 300
    s_scale, margin = 64.0, 0.35

    key = jax.random.PRNGKey(0)
    kx, kw, kl = jax.random.split(key, 3)

    x = jax.random.normal(kx, (B, in_features), dtype=jnp.float32)

    # Xavier-uniform init of weight (out_features, in_features), gain=1:
    bound = (6.0 / (in_features + out_features)) ** 0.5
    weight = jax.random.uniform(kw, (out_features, in_features),
                                dtype=jnp.float32, minval=-bound, maxval=bound)

    label = jax.random.randint(kl, (B,), 0, out_features, dtype=jnp.int32)

    loss = cosface_loss(x, weight, label, s=s_scale, m=margin, tb=8, tc=128)
    loss = jax.block_until_ready(loss)

    loss_ref_val = cosface_loss_ref(x, weight, label, s=s_scale, m=margin)
    # bf16 MXU matmul + s=64 scaling -> loosen tolerance vs. the f32 reference.
    assert jnp.allclose(loss, loss_ref_val, rtol=2e-2, atol=2e-2), (loss, loss_ref_val)

    print("KERNEL_OK")
</pallas_src>

<mosaic_0001>
module attributes {stable_mosaic.version = 11 : i64} {
  func.func @_cosface_kernel(%arg0: i32, %arg1: i32, %arg2: memref<8x128xf32, #tpu.memory_space<vmem>>, %arg3: memref<128x128xf32, #tpu.memory_space<vmem>>, %arg4: memref<8x1xi32, #tpu.memory_space<vmem>>, %arg5: memref<8x1xf32, #tpu.memory_space<vmem>>, %arg6: memref<8x128xbf16, #tpu.memory_space<vmem>>, %arg7: memref<8x1xf32, #tpu.memory_space<vmem>>, %arg8: memref<8x1xf32, #tpu.memory_space<vmem>>, %arg9: memref<8x1xf32, #tpu.memory_space<vmem>>) attributes {dimension_semantics = [#tpu.dimension_semantics<parallel>, #tpu.dimension_semantics<arbitrary>], iteration_bounds = array<i64: 2, 3>, scalar_prefetch = 0 : i64, scratch_operands = 4 : i64, tpu.core_type = #tpu.core_type<tc>, window_params = [{transform_indices = @transform_0, window_bounds = array<i64: 8, 128>}, {transform_indices = @transform_1, window_bounds = array<i64: 128, 128>}, {transform_indices = @transform_2, window_bounds = array<i64: 8, 1>}, {transform_indices = @transform_3, window_bounds = array<i64: 8, 1>}]} {
    %c0_i32 = arith.constant 0 : i32
    %0 = arith.cmpi eq, %arg1, %c0_i32 : i32
    %1 = arith.extui %0 : i1 to i32
    %c0_i32_0 = arith.constant 0 : i32
    %2 = arith.cmpi ne, %1, %c0_i32_0 : i32
    scf.if %2 {
      %c0_30 = arith.constant 0 : index
      %c0_31 = arith.constant 0 : index
      %58 = vector.load %arg2[%c0_30, %c0_31] : memref<8x128xf32, #tpu.memory_space<vmem>>, vector<8x128xf32>
      %59 = arith.mulf %58, %58 : vector<8x128xf32>
      %cst_32 = arith.constant dense<0.000000e+00> : vector<8xf32>
      %60 = vector.multi_reduction <add>, %59, %cst_32 [1] : vector<8x128xf32> to vector<8xf32>
      %61 = vector.shape_cast %60 : vector<8xf32> to vector<8x1xf32>
      %cst_33 = arith.constant 1.000000e-24 : f32
      %62 = vector.broadcast %cst_33 : f32 to vector<8x1xf32>
      %63 = arith.maximumf %61, %62 : vector<8x1xf32>
      %64 = math.rsqrt %63 : vector<8x1xf32>
      %65 = vector.broadcast %64 : vector<8x1xf32> to vector<8x128xf32>
      %66 = arith.mulf %58, %65 : vector<8x128xf32>
      %67 = arith.truncf %66 : vector<8x128xf32> to vector<8x128xbf16>
      %c0_34 = arith.constant 0 : index
      %c0_35 = arith.constant 0 : index
      %68 = vector.load %arg6[%c0_34, %c0_35] : memref<8x128xbf16, #tpu.memory_space<vmem>>, vector<8x128xbf16>
      tpu.vector_store %arg6[%c0_34, %c0_35], %67 {strides = array<i32>} : memref<8x128xbf16, #tpu.memory_space<vmem>>, vector<8x128xbf16>,
      %cst_36 = arith.constant -1.000000e+30 : f32
      %69 = vector.broadcast %cst_36 : f32 to vector<8x1xf32>
      %c0_37 = arith.constant 0 : index
      %c0_38 = arith.constant 0 : index
      %70 = vector.load %arg7[%c0_37, %c0_38] : memref<8x1xf32, #tpu.memory_space<vmem>>, vector<8x1xf32>
      tpu.vector_store %arg7[%c0_37, %c0_38], %69 {strides = array<i32>} : memref<8x1xf32, #tpu.memory_space<vmem>>, vector<8x1xf32>,
      %cst_39 = arith.constant 0.000000e+00 : f32
      %71 = vector.broadcast %cst_39 : f32 to vector<8x1xf32>
      %c0_40 = arith.constant 0 : index
      %c0_41 = arith.constant 0 : index
      %72 = vector.load %arg8[%c0_40, %c0_41] : memref<8x1xf32, #tpu.memory_space<vmem>>, vector<8x1xf32>
      tpu.vector_store %arg8[%c0_40, %c0_41], %71 {strides = array<i32>} : memref<8x1xf32, #tpu.memory_space<vmem>>, vector<8x1xf32>,
      %cst_42 = arith.constant 0.000000e+00 : f32
      %73 = vector.broadcast %cst_42 : f32 to vector<8x1xf32>
      %c0_43 = arith.constant 0 : index
      %c0_44 = arith.constant 0 : index
      %74 = vector.load %arg9[%c0_43, %c0_44] : memref<8x1xf32, #tpu.memory_space<vmem>>, vector<8x1xf32>
      tpu.vector_store %arg9[%c0_43, %c0_44], %73 {strides = array<i32>} : memref<8x1xf32, #tpu.memory_space<vmem>>, vector<8x1xf32>,
    } else {
    }
    %c0 = arith.constant 0 : index
    %c0_1 = arith.constant 0 : index
    %3 = vector.load %arg3[%c0, %c0_1] : memref<128x128xf32, #tpu.memory_space<vmem>>, vector<128x128xf32>
    %4 = arith.mulf %3, %3 : vector<128x128xf32>
    %cst = arith.constant dense<0.000000e+00> : vector<128xf32>
    %5 = vector.multi_reduction <add>, %4, %cst [0] : vector<128x128xf32> to vector<128xf32>
    %6 = vector.shape_cast %5 : vector<128xf32> to vector<1x128xf32>
    %cst_2 = arith.constant 1.000000e-24 : f32
    %7 = vector.broadcast %cst_2 : f32 to vector<1x128xf32>
    %8 = arith.maximumf %6, %7 : vector<1x128xf32>
    %9 = math.rsqrt %8 : vector<1x128xf32>
    %10 = vector.broadcast %9 : vector<1x128xf32> to vector<128x128xf32>
    %11 = arith.mulf %3, %10 : vector<128x128xf32>
    %12 = arith.truncf %11 : vector<128x128xf32> to vector<128x128xbf16>
    %c0_3 = arith.constant 0 : index
    %c0_4 = arith.constant 0 : index
    %13 = vector.load %arg6[%c0_3, %c0_4] : memref<8x128xbf16, #tpu.memory_space<vmem>>, vector<8x128xbf16>
    %cst_5 = arith.constant dense<0.000000e+00> : vector<8x128xf32>
    %14 = tpu.matmul %13, %12, %cst_5 {dimension_numbers = #tpu.dot_dimension_numbers<[1], [0], [0], [1], [0, 0, 1, 1], [], []>} : vector<8x128xbf16>, vector<128x128xbf16>, vector<8x128xf32> -> vector<8x128xf32>
    %c128_i32 = arith.constant 128 : i32
    %15 = arith.muli %arg1, %c128_i32 : i32
    %16 = tpu.iota {dimensions = array<i32: 1>} : vector<8x128xi32>
    %17 = vector.broadcast %15 : i32 to vector<8x128xi32>
    %18 = arith.addi %17, %16 : vector<8x128xi32>
    %c0_6 = arith.constant 0 : index
    %c0_7 = arith.constant 0 : index
    %19 = vector.load %arg4[%c0_6, %c0_7] : memref<8x1xi32, #tpu.memory_space<vmem>>, vector<8x1xi32>
    %20 = vector.broadcast %19 : vector<8x1xi32> to vector<8x128xi32>
    %21 = arith.cmpi eq, %18, %20 : vector<8x128xi32>
    %c300_i32 = arith.constant 300 : i32
    %22 = vector.broadcast %c300_i32 : i32 to vector<8x128xi32>
    %23 = arith.cmpi slt, %18, %22 : vector<8x128xi32>
    %cst_8 = arith.constant 6.400000e+01 : f32
    %24 = vector.broadcast %cst_8 : f32 to vector<8x128xf32>
    %25 = arith.mulf %24, %14 : vector<8x128xf32>
    %cst_9 = arith.constant 2.240000e+01 : f32
    %26 = vector.broadcast %cst_9 : f32 to vector<8x128xf32>
    %27 = arith.subf %25, %26 : vector<8x128xf32>
    %28 = arith.select %21, %27, %25 : vector<8x128xi1>, vector<8x128xf32>
    %cst_10 = arith.constant -1.000000e+30 : f32
    %29 = vector.broadcast %cst_10 : f32 to vector<8x128xf32>
    %30 = arith.select %23, %28, %29 : vector<8x128xi1>, vector<8x128xf32>
    %cst_11 = arith.constant dense<0xFF800000> : vector<8xf32>
    %31 = vector.multi_reduction <maximumf>, %30, %cst_11 [1] : vector<8x128xf32> to vector<8xf32>
    %32 = vector.shape_cast %31 : vector<8xf32> to vector<8x1xf32>
    %c0_12 = arith.constant 0 : index
    %c0_13 = arith.constant 0 : index
    %33 = vector.load %arg7[%c0_12, %c0_13] : memref<8x1xf32, #tpu.memory_space<vmem>>, vector<8x1xf32>
    %34 = arith.maximumf %33, %32 : vector<8x1xf32>
    %c0_14 = arith.constant 0 : index
    %c0_15 = arith.constant 0 : index
    %35 = vector.load %arg7[%c0_14, %c0_15] : memref<8x1xf32, #tpu.memory_space<vmem>>, vector<8x1xf32>
    %36 = arith.subf %35, %34 : vector<8x1xf32>
    %37 = math.exp %36 : vector<8x1xf32>
    %38 = vector.broadcast %34 : vector<8x1xf32> to vector<8x128xf32>
    %39 = arith.subf %30, %38 : vector<8x128xf32>
    %40 = math.exp %39 : vector<8x128xf32>
    %cst_16 = arith.constant dense<0.000000e+00> : vector<8xf32>
    %41 = vector.multi_reduction <add>, %40, %cst_16 [1] : vector<8x128xf32> to vector<8xf32>
    %42 = vector.shape_cast %41 : vector<8xf32> to vector<8x1xf32>
    %c0_17 = arith.constant 0 : index
    %c0_18 = arith.constant 0 : index
    %43 = vector.load %arg8[%c0_17, %c0_18] : memref<8x1xf32, #tpu.memory_space<vmem>>, vector<8x1xf32>
    %44 = arith.mulf %37, %43 : vector<8x1xf32>
    %45 = arith.addf %44, %42 : vector<8x1xf32>
    %c0_19 = arith.constant 0 : index
    %c0_20 = arith.constant 0 : index
    %46 = vector.load %arg8[%c0_19, %c0_20] : memref<8x1xf32, #tpu.memory_space<vmem>>, vector<8x1xf32>
    tpu.vector_store %arg8[%c0_19, %c0_20], %45 {strides = array<i32>} : memref<8x1xf32, #tpu.memory_space<vmem>>, vector<8x1xf32>,
    %c0_21 = arith.constant 0 : index
    %c0_22 = arith.constant 0 : index
    %47 = vector.load %arg7[%c0_21, %c0_22] : memref<8x1xf32, #tpu.memory_space<vmem>>, vector<8x1xf32>
    tpu.vector_store %arg7[%c0_21, %c0_22], %34 {strides = array<i32>} : memref<8x1xf32, #tpu.memory_space<vmem>>, vector<8x1xf32>,
    %c0_23 = arith.constant 0 : index
    %c0_24 = arith.constant 0 : index
    %48 = vector.load %arg9[%c0_23, %c0_24] : memref<8x1xf32, #tpu.memory_space<vmem>>, vector<8x1xf32>
    %cst_25 = arith.constant 0.000000e+00 : f32
    %49 = vector.broadcast %cst_25 : f32 to vector<8x128xf32>
    %50 = arith.select %21, %30, %49 : vector<8x128xi1>, vector<8x128xf32>
    %cst_26 = arith.constant dense<0.000000e+00> : vector<8xf32>
    %51 = vector.multi_reduction <add>, %50, %cst_26 [1] : vector<8x128xf32> to vector<8xf32>
    %52 = vector.shape_cast %51 : vector<8xf32> to vector<8x1xf32>
    %53 = arith.addf %48, %52 : vector<8x1xf32>
    %c0_27 = arith.constant 0 : index
    %c0_28 = arith.constant 0 : index
    %54 = vector.load %arg9[%c0_27, %c0_28] : memref<8x1xf32, #tpu.memory_space<vmem>>, vector<8x1xf32>
    tpu.vector_store %arg9[%c0_27, %c0_28], %53 {strides = array<i32>} : memref<8x1xf32, #tpu.memory_space<vmem>>, vector<8x1xf32>,
    %c2_i32 = arith.constant 2 : i32
    %55 = arith.cmpi eq, %arg1, %c2_i32 : i32
    %56 = arith.extui %55 : i1 to i32
    %c0_i32_29 = arith.constant 0 : i32
    %57 = arith.cmpi ne, %56, %c0_i32_29 : i32
    scf.if %57 {
      %c8_i32 = arith.constant 8 : i32
      %58 = arith.muli %arg0, %c8_i32 : i32
      %59 = tpu.iota {dimensions = array<i32: 0>} : vector<8x1xi32>
      %60 = vector.broadcast %58 : i32 to vector<8x1xi32>
      %61 = arith.addi %60, %59 : vector<8x1xi32>
      %c12_i32 = arith.constant 12 : i32
      %62 = vector.broadcast %c12_i32 : i32 to vector<8x1xi32>
      %63 = arith.cmpi slt, %61, %62 : vector<8x1xi32>
      %c0_30 = arith.constant 0 : index
      %c0_31 = arith.constant 0 : index
      %64 = vector.load %arg7[%c0_30, %c0_31] : memref<8x1xf32, #tpu.memory_space<vmem>>, vector<8x1xf32>
      %c0_32 = arith.constant 0 : index
      %c0_33 = arith.constant 0 : index
      %65 = vector.load %arg8[%c0_32, %c0_33] : memref<8x1xf32, #tpu.memory_space<vmem>>, vector<8x1xf32>
      %66 = math.log %65 : vector<8x1xf32>
      %67 = arith.addf %64, %66 : vector<8x1xf32>
      %c0_34 = arith.constant 0 : index
      %c0_35 = arith.constant 0 : index
      %68 = vector.load %arg9[%c0_34, %c0_35] : memref<8x1xf32, #tpu.memory_space<vmem>>, vector<8x1xf32>
      %69 = arith.subf %67, %68 : vector<8x1xf32>
      %cst_36 = arith.constant 0.000000e+00 : f32
      %70 = vector.broadcast %cst_36 : f32 to vector<8x1xf32>
      %71 = arith.select %63, %69, %70 : vector<8x1xi1>, vector<8x1xf32>
      %c0_37 = arith.constant 0 : index
      %c0_38 = arith.constant 0 : index
      %72 = vector.load %arg5[%c0_37, %c0_38] : memref<8x1xf32, #tpu.memory_space<vmem>>, vector<8x1xf32>
      tpu.vector_store %arg5[%c0_37, %c0_38], %71 {strides = array<i32>} : memref<8x1xf32, #tpu.memory_space<vmem>>, vector<8x1xf32>,
    } else {
    }
    return
  }
  func.func @transform_0(%arg0: i32, %arg1: i32) -> (i32, i32) {
    %c0_i32 = arith.constant 0 : i32
    %c0_i32_0 = arith.constant 0 : i32
    return %arg0, %c0_i32 : i32, i32
  }
  func.func @transform_1(%arg0: i32, %arg1: i32) -> (i32, i32) {
    %c0_i32 = arith.constant 0 : i32
    %c0_i32_0 = arith.constant 0 : i32
    return %c0_i32, %arg1 : i32, i32
  }
  func.func @transform_2(%arg0: i32, %arg1: i32) -> (i32, i32) {
    %c0_i32 = arith.constant 0 : i32
    %c0_i32_0 = arith.constant 0 : i32
    return %arg0, %c0_i32 : i32, i32
  }
  func.func @transform_3(%arg0: i32, %arg1: i32) -> (i32, i32) {
    %c0_i32 = arith.constant 0 : i32
    %c0_i32_0 = arith.constant 0 : i32
    return %arg0, %c0_i32 : i32, i32
  }
}

</mosaic_0001>

<llo_original>
// kernel: tpu_custom_call.1
$region0: #{tpu_custom_call.1}
  #allocation0 [shape = 'u32[]', space=smem, size = 0x4, offset = 0x4, fixed_abs, tag = 'smem constant byte address 0x4 - core index']
  #allocation1 [shape = 'u32[144,128]{1,0:T(1,128)}', space=vmem, size = 0x12000, scoped, tag = 'internal scratch']
  #allocation2 [shape = 'bf16[8,128]{1,0:T(8,128)(2,1)}', space=vmem, size = 0x800, scoped, tag = 'scratch operand']
  #allocation3 [shape = 'f32[8,1]{1,0:T(8,128)}', space=vmem, size = 0x1000, scoped, tag = 'scratch operand']
  #allocation4 [shape = 'f32[8,1]{1,0:T(8,128)}', space=vmem, size = 0x1000, scoped, tag = 'scratch operand']
  #allocation5 [shape = 'f32[8,1]{1,0:T(8,128)}', space=vmem, size = 0x1000, scoped, tag = 'scratch operand']
  %s0 = inlined_call_operand.vmem [shape: f32[16,128], index: 0, kind: input, shape index: {}]
  %s1 = inlined_call_operand.hbm [shape: f32[128,384], index: 1, kind: input, shape index: {}]
  %s2 = inlined_call_operand.vmem [shape: s32[16,1], index: 2, kind: input, shape index: {}]
  %s3 = inlined_call_operand.vmem [shape: f32[16,1], index: 3, kind: output, shape index: {}]
  %s4 = sld [smem:[#allocation0]]
  $region57: #{tpu_custom_call.1} parent=0
    _
  %s6 = ssub.s32 1, %s4
  %s7 = scalar_select 0, %s6, %s4
  $region1: #{tpu_custom_call.1} parent=0
    #allocation6 [shape = 'u8[131072]{0}', space=vmem, size = 0x20000, scoped, tag = 'input window, operand 1']
    #allocation7 [shape = 's32[2]{0}', space=sflag, size = 0x8, scoped, tag = 'scoped memory for tpu_custom_call.1']
    %8 = vsyncpa [#allocation7], 0
    %s9 = scalar_lea.sflag [#allocation7], 1
    %10 = vsyncpa %s9, 0
    loop: start=0, step=1, limit=8
    $region2: #{tpu_custom_call.1} parent=1 // loop_pre_header
      _
    $region3: #{tpu_custom_call.1} parent=1 // loop_header
      %s12 = sphi 0, %s16
      %p13 = scmp.ge.s32.totalorder %s12, 8
      %s19 = sphi 0, %s31
      %s20 = sphi 0, %s27
      %s21 = sphi 0, %s19
      %s22 = sphi 0, %s20
      %s23 = sphi 0, %s21
      %s24 = sphi 0, %s22
      %s34 = sphi 0, %s36
      %s37 = sphi 0, %s34
      %s38 = sphi 0, %s37
      %s54 = sphi 0, %s38
      %s60 = sphi 0, %s62
      %s63 = sphi 0, %s60
      %s64 = sphi 0, %s63
      %s80 = sphi 0, %s64
      %s86 = sphi 0, %s88
      %s89 = sphi 0, %s86
      %s90 = sphi 0, %s89
      %s106 = sphi 0, %s90
      %s112 = sphi 0, %s114
      %s115 = sphi 0, %s112
      %s116 = sphi 0, %s115
      %s132 = sphi 0, %s116
    $region4: #{tpu_custom_call.1} parent=1 // loop_header_branch
      %15 = sbr.rel (%p13) target = $region8
    $region5: #{tpu_custom_call.1} parent=1 // loop_body
      %s17 = ssub.s32 %s12, 1
      %s18 = ssub.s32 %s12, 2
      %s25 = sadd.s32 1, %s20
      %p26 = scmp.ge.s32.totalorder %s25, 3
      %s27 = scalar_select %p26, 0, %s25
      %s28 = sadd.s32 1, %s19
      %s29 = scalar_select %p26, %s28, %s19
      %p30 = scmp.ge.s32.totalorder %s29, 2
      %s31 = scalar_select %p30, 0, %s29
      %s32 = ssub.s32 %s19, %s31
      %p33 = scmp.eq.s32.totalorder %s32, 0
      %s35 = sadd.s32 %s34, 1
      %s36 = scalar_select %p33, %s34, %s35
      %p39 = pneg %p33
      %p40 = scmp.eq.s32.totalorder %s12, 5
      %p41 = por %p39, %p40
      %p42 = scmp.ne.s32.totalorder %s34, %s37
      %p43 = scmp.eq.s32.totalorder %s12, 0
      %p44 = por %p42, %p43
      %p45 = scmp.ne.s32.totalorder %s34, %s37
      %p46 = scmp.eq.s32.totalorder %s17, 5
      %p47 = por %p45, %p46
      %p48 = scmp.ne.s32.totalorder %s37, %s38
      %p49 = scmp.eq.s32.totalorder %s17, 0
      %p50 = por %p48, %p49
      %p51 = scmp.ne.s32.totalorder %s37, %s38
      %p52 = scmp.eq.s32.totalorder %s18, 5
      %p53 = por %p51, %p52
      %p55 = scmp.ne.s32.totalorder %s38, %s54
      %p56 = scmp.eq.s32.totalorder %s18, 0
      %p57 = por %p55, %p56
      %s58 = ssub.s32 %s20, %s27
      %p59 = scmp.eq.s32.totalorder %s58, 0
      %s61 = sadd.s32 %s60, 1
      %s62 = scalar_select %p59, %s60, %s61
      %p65 = pneg %p59
      %p66 = scmp.eq.s32.totalorder %s12, 5
      %p67 = por %p65, %p66
      %p68 = scmp.ne.s32.totalorder %s60, %s63
      %p69 = scmp.eq.s32.totalorder %s12, 0
      %p70 = por %p68, %p69
      %p71 = scmp.ne.s32.totalorder %s60, %s63
      %p72 = scmp.eq.s32.totalorder %s17, 5
      %p73 = por %p71, %p72
      %p74 = scmp.ne.s32.totalorder %s63, %s64
      %p75 = scmp.eq.s32.totalorder %s17, 0
      %p76 = por %p74, %p75
      %p77 = scmp.ne.s32.totalorder %s63, %s64
      %p78 = scmp.eq.s32.totalorder %s18, 5
      %p79 = por %p77, %p78
      %p81 = scmp.ne.s32.totalorder %s64, %s80
      %p82 = scmp.eq.s32.totalorder %s18, 0
      %p83 = por %p81, %p82
      %s84 = ssub.s32 %s19, %s31
      %p85 = scmp.eq.s32.totalorder %s84, 0
      %s87 = sadd.s32 %s86, 1
      %s88 = scalar_select %p85, %s86, %s87
      %p91 = pneg %p85
      %p92 = scmp.eq.s32.totalorder %s12, 5
      %p93 = por %p91, %p92
      %p94 = scmp.ne.s32.totalorder %s86, %s89
      %p95 = scmp.eq.s32.totalorder %s12, 0
      %p96 = por %p94, %p95
      %p97 = scmp.ne.s32.totalorder %s86, %s89
      %p98 = scmp.eq.s32.totalorder %s17, 5
      %p99 = por %p97, %p98
      %p100 = scmp.ne.s32.totalorder %s89, %s90
      %p101 = scmp.eq.s32.totalorder %s17, 0
      %p102 = por %p100, %p101
      %p103 = scmp.ne.s32.totalorder %s89, %s90
      %p104 = scmp.eq.s32.totalorder %s18, 5
      %p105 = por %p103, %p104
      %p107 = scmp.ne.s32.totalorder %s90, %s106
      %p108 = scmp.eq.s32.totalorder %s18, 0
      %p109 = por %p107, %p108
      %s110 = ssub.s32 %s19, %s31
      %p111 = scmp.eq.s32.totalorder %s110, 0
      %s113 = sadd.s32 %s112, 1
      %s114 = scalar_select %p111, %s112, %s113
      %p117 = pneg %p111
      %p118 = scmp.eq.s32.totalorder %s12, 5
      %p119 = por %p117, %p118
      %p120 = scmp.ne.s32.totalorder %s112, %s115
      %p121 = scmp.eq.s32.totalorder %s12, 0
      %p122 = por %p120, %p121
      %p123 = scmp.ne.s32.totalorder %s112, %s115
      %p124 = scmp.eq.s32.totalorder %s17, 5
      %p125 = por %p123, %p124
      %p126 = scmp.ne.s32.totalorder %s115, %s116
      %p127 = scmp.eq.s32.totalorder %s17, 0
      %p128 = por %p126, %p127
      %p129 = scmp.ne.s32.totalorder %s115, %s116
      %p130 = scmp.eq.s32.totalorder %s18, 5
      %p131 = por %p129, %p130
      %p133 = scmp.ne.s32.totalorder %s116, %s132
      %p134 = scmp.eq.s32.totalorder %s18, 0
      %p135 = por %p133, %p134
      %p136 = scmp.le.s32.totalorder 1, %s12
      %p137 = scmp.lt.s32.totalorder %s12, 7
      %p138 = pnand %p136, %p137
      %p139 = pneg %p138
      // Predicated region
      $region9: #{tpu_custom_call.1} parent=5 // pred_check
        _
      $region10: #{tpu_custom_call.1} parent=5 // pred_check_branch
        %141 = sbr.rel (%p138) target = $region12
      $region11: #{tpu_custom_call.1} parent=5 // pred_region
        %s142 = ssub.s32 %s12, 1
      $region12: #{tpu_custom_call.1} parent=5 // pred_fallthru
        _
      %p143 = scmp.lt.s32.totalorder %s12, 6
      // Predicated region
      $region13: #{tpu_custom_call.1} parent=5 // pred_check
        %p144 = pneg %p143
      $region14: #{tpu_custom_call.1} parent=5 // pred_check_branch
        %146 = sbr.rel (%p144) target = $region16
      $region15: #{tpu_custom_call.1} parent=5 // pred_region
        // Predicated region
        $region17: #{tpu_custom_call.1} parent=15 // pred_check
          %p147 = pneg %p44
        $region18: #{tpu_custom_call.1} parent=15 // pred_check_branch
          %149 = sbr.rel (%p147) target = $region20
        $region19: #{tpu_custom_call.1} parent=15 // pred_region
          %p150 = scmp.lt.s32.totalorder %s19, 1
          %s151 = scalar_select %p150, %s19, 1
          %s152 = smul.addr %s151, 8
          %s153 = scalar_lea.vmem %s0, %s152
        $region20: #{tpu_custom_call.1} parent=15 // pred_fallthru
          _
        // Predicated region
        $region21: #{tpu_custom_call.1} parent=15 // pred_check
          %p154 = pneg %p70
        $region22: #{tpu_custom_call.1} parent=15 // pred_check_branch
          %156 = sbr.rel (%p154) target = $region24
        $region23: #{tpu_custom_call.1} parent=15 // pred_region
          %s157 = sand.u32 %s60, 1
          %s158 = scalar_lea.sflag [#allocation7], %s157
          %s159 = sand.u32 %s60, 1
          %s160 = smul.addr %s159, 128
          %s161 = scalar_lea.vmem [#allocation6], %s160
          %s163 = ssub.s32 2048, 2048
          %164 = vsyncadd %s158, %s163
          %s165 = smul.addr %s20, 128
          %s166 = scalar_lea.hbm %s1, %s165
          %s167 = sshll.u32 %s161, 4
          %s168 = int_to_ptr.vmem [resolvable:$true] %s167
          %173 = dma.hbm_to_vmem [thread:$0]  %s166, 2048, %s168, %s158, 384, 128, 8
        $region24: #{tpu_custom_call.1} parent=15 // pred_fallthru
          _
        // Predicated region
        $region25: #{tpu_custom_call.1} parent=15 // pred_check
          %p174 = pneg %p96
        $region26: #{tpu_custom_call.1} parent=15 // pred_check_branch
          %176 = sbr.rel (%p174) target = $region28
        $region27: #{tpu_custom_call.1} parent=15 // pred_region
          %p177 = scmp.lt.s32.totalorder %s19, 1
          %s178 = scalar_select %p177, %s19, 1
          %s179 = smul.addr %s178, 8
          %s180 = scalar_lea.vmem %s2, %s179
        $region28: #{tpu_custom_call.1} parent=15 // pred_fallthru
          _
      $region16: #{tpu_custom_call.1} parent=5 // pred_fallthru
        _
      %p181 = scmp.le.s32.totalorder 1, %s12
      %p182 = scmp.lt.s32.totalorder %s12, 7
      %p183 = pnand %p181, %p182
      %p184 = pneg %p183
      // Predicated region
      $region29: #{tpu_custom_call.1} parent=5 // pred_check
        _
      $region30: #{tpu_custom_call.1} parent=5 // pred_check_branch
        %186 = sbr.rel (%p183) target = $region32
      $region31: #{tpu_custom_call.1} parent=5 // pred_region
        %s187 = ssub.s32 %s12, 1
        %s188 = sand.u32 %s63, 1
        %s189 = scalar_lea.sflag [#allocation7], %s188
        %s190 = sand.u32 %s63, 1
        %s191 = smul.addr %s190, 128
        %s192 = scalar_lea.vmem [#allocation6], %s191
        // Predicated region
        $region33: #{tpu_custom_call.1} parent=31 // pred_check
          %p193 = pneg %p76
        $region34: #{tpu_custom_call.1} parent=31 // pred_check_branch
          %195 = sbr.rel (%p193) target = $region36
        $region35: #{tpu_custom_call.1} parent=31 // pred_region
          %196 = dma.done %s189, 2048
        $region36: #{tpu_custom_call.1} parent=31 // pred_fallthru
          _
        %p197 = scmp.lt.s32.totalorder %s21, 1
        %s198 = scalar_select %p197, %s21, 1
        %s199 = smul.addr %s198, 8
        %s200 = scalar_lea.vmem %s0, %s199
        %p201 = pneg %p50
        %p202 = pneg %p47
        %s203 = sand.u32 %s63, 1
        %s204 = scalar_lea.sflag [#allocation7], %s203
        %s205 = sand.u32 %s63, 1
        %s206 = smul.addr %s205, 128
        %s207 = scalar_lea.vmem [#allocation6], %s206
        %p208 = pneg %p76
        %p209 = pneg %p73
        %p210 = scmp.lt.s32.totalorder %s21, 1
        %s211 = scalar_select %p210, %s21, 1
        %s212 = smul.addr %s211, 8
        %s213 = scalar_lea.vmem %s2, %s212
        %p214 = pneg %p102
        %p215 = pneg %p99
        %p216 = pneg %p128
        %p217 = pneg %p125
        %p218 = scmp.lt.s32.totalorder %s21, 1
        %s219 = scalar_select %p218, %s21, 1
        %s220 = smul.addr %s219, 8
        %s221 = scalar_lea.vmem %s3, %s220
        %p222 = scmp.lt.s32.totalorder %s21, 1
        %s223 = scalar_select %p222, %s21, 1
        %s224 = smul.addr %s223, 8
        %s225 = scalar_lea.vmem %s0, %s224
        %p226 = scmp.lt.s32.totalorder %s21, 1
        %s227 = scalar_select %p226, %s21, 1
        %s228 = smul.addr %s227, 8
        %s229 = scalar_lea.vmem %s2, %s228
        %p230 = scmp.lt.s32.totalorder %s21, 1
        %s231 = scalar_select %p230, %s21, 1
        %s232 = smul.addr %s231, 8
        %s233 = scalar_lea.vmem %s3, %s232
        %p235 = scmp.eq.s32.totalorder %s22, 0
        // Predicated region
        $region37: #{tpu_custom_call.1} parent=31 // pred_check
          %p236 = pneg %p235
        $region38: #{tpu_custom_call.1} parent=31 // pred_check_branch
          %238 = sbr.rel (%p236) target = $region40
        $region39: #{tpu_custom_call.1} parent=31 // pred_region
          %v239 = vld [vmem:[%s225] sm:$0xff]
          %v240 = vmul.f32 %v239, %v239
          %241 = vadd.xlane.f32.xlu0 %v240
          %v242 = vpop.xlane.xlu0 %241
          %v243 = vmax.f32 %v242, 1e-24
          %v244 = vrsqrt.pop %v243
          %v245 = vmul.f32 %v239, %v244
          %v246 = vpack.c.bf16 %v245, %v245
          %247 = vst [vmem:[#allocation2] sm:$0xf] %v246
          %vm248 = vcmask 7168
          %249 = vst.msk [vmem:[#allocation3] sm:$0xff] %vm248, -1e+30
          %250 = vst.msk [vmem:[#allocation4] sm:$0xff] %vm248, 0.0
          %251 = vst.msk [vmem:[#allocation5] sm:$0xff] %vm248, 0.0
        $region40: #{tpu_custom_call.1} parent=31 // pred_fallthru
          _
        %v252 = vld [vmem:[%s192] sm:$0xff]
        %v253 = vld [vmem:[%s192 + $0x8] sm:$0xff]
        %v254 = vld [vmem:[%s192 + $0x10] sm:$0xff]
        %v255 = vld [vmem:[%s192 + $0x18] sm:$0xff]
        %v256 = vld [vmem:[%s192 + $0x20] sm:$0xff]
        %v257 = vld [vmem:[%s192 + $0x28] sm:$0xff]
        %v258 = vld [vmem:[%s192 + $0x30] sm:$0xff]
        %v259 = vld [vmem:[%s192 + $0x38] sm:$0xff]
        %v260 = vld [vmem:[%s192 + $0x40] sm:$0xff]
        %v261 = vld [vmem:[%s192 + $0x48] sm:$0xff]
        %v262 = vld [vmem:[%s192 + $0x50] sm:$0xff]
        %v263 = vld [vmem:[%s192 + $0x58] sm:$0xff]
        %v264 = vld [vmem:[%s192 + $0x60] sm:$0xff]
        %v265 = vld [vmem:[%s192 + $0x68] sm:$0xff]
        %v266 = vld [vmem:[%s192 + $0x70] sm:$0xff]
        %v267 = vld [vmem:[%s192 + $0x78] sm:$0xff]
        %v268 = vmul.f32 %v252, %v252
        %v269 = vmul.f32 %v253, %v253
        %v270 = vmul.f32 %v254, %v254
        %v271 = vmul.f32 %v255, %v255
        %v272 = vmul.f32 %v256, %v256
        %v273 = vmul.f32 %v257, %v257
        %v274 = vmul.f32 %v258, %v258
        %v275 = vmul.f32 %v259, %v259
        %v276 = vmul.f32 %v260, %v260
        %v277 = vmul.f32 %v261, %v261
        %v278 = vmul.f32 %v262, %v262
        %v279 = vmul.f32 %v263, %v263
        %v280 = vmul.f32 %v264, %v264
        %v281 = vmul.f32 %v265, %v265
        %v282 = vmul.f32 %v266, %v266
        %v283 = vmul.f32 %v267, %v267
        %v284 = vadd.f32 %v268, %v269
        %v285 = vadd.f32 %v284, %v270
        %v286 = vadd.f32 %v285, %v271
        %v287 = vadd.f32 %v286, %v272
        %v288 = vadd.f32 %v287, %v273
        %v289 = vadd.f32 %v288, %v274
        %v290 = vadd.f32 %v289, %v275
        %v291 = vadd.f32 %v290, %v276
        %v292 = vadd.f32 %v291, %v277
        %v293 = vadd.f32 %v292, %v278
        %v294 = vadd.f32 %v293, %v279
        %v295 = vadd.f32 %v294, %v280
        %v296 = vadd.f32 %v295, %v281
        %v297 = vadd.f32 %v296, %v282
        %v298 = vadd.f32 %v297, %v283
        %v299 = vrot.slane %v298, 4
        %v300 = vadd.f32 %v298, %v299
        %v301 = vrot.slane %v300, 2
        %v302 = vadd.f32 %v300, %v301
        %v303 = vrot.slane %v302, 1
        %v304 = vadd.f32 %v302, %v303
        %v305 = vmax.f32 %v304, 1e-24
        %v306 = vrsqrt.pop %v305
        %v307 = vmul.f32 %v252, %v306
        %v308 = vmul.f32 %v253, %v306
        %v309 = vmul.f32 %v254, %v306
        %v310 = vmul.f32 %v255, %v306
        %v311 = vmul.f32 %v256, %v306
        %v312 = vmul.f32 %v257, %v306
        %v313 = vmul.f32 %v258, %v306
        %v314 = vmul.f32 %v259, %v306
        %v315 = vmul.f32 %v260, %v306
        %v316 = vmul.f32 %v261, %v306
        %v317 = vmul.f32 %v262, %v306
        %v318 = vmul.f32 %v263, %v306
        %v319 = vmul.f32 %v264, %v306
        %v320 = vmul.f32 %v265, %v306
        %v321 = vmul.f32 %v266, %v306
        %v322 = vmul.f32 %v267, %v306
        %v323 = vpack.c.bf16 %v308, %v307
        %v324 = vpack.c.bf16 %v310, %v309
        %v325 = vpack.c.bf16 %v312, %v311
        %v326 = vpack.c.bf16 %v314, %v313
        %v327 = vpack.c.bf16 %v316, %v315
        %v328 = vpack.c.bf16 %v318, %v317
        %v329 = vpack.c.bf16 %v320, %v319
        %v330 = vpack.c.bf16 %v322, %v321
        %v331 = vld [vmem:[#allocation2] sm:$0xf]
        %332 = vmatprep.subr.bf16.mxu0 0
        %333 = vmatpush1.bf16.msra.mxu0 %v330
        %334 = vmatprep.subr.bf16.mxu0 0
        %335 = vmatpush1.bf16.msra.mxu0 %v329
        %336 = vmatprep.subr.bf16.mxu0 0
        %337 = vmatpush1.bf16.msra.mxu0 %v328
        %338 = vmatprep.subr.bf16.mxu0 0
        %339 = vmatpush1.bf16.msra.mxu0 %v327
        %340 = vmatprep.subr.bf16.mxu0 0
        %341 = vmatpush1.bf16.msra.mxu0 %v326
        %342 = vmatprep.subr.bf16.mxu0 0
        %343 = vmatpush1.bf16.msra.mxu0 %v325
        %344 = vmatprep.subr.bf16.mxu0 0
        %345 = vmatpush1.bf16.msra.mxu0 %v324
        %346 = vmatprep.subr.bf16.mxu0 0
        %347 = vmatpush1.bf16.msra.mxu0 %v323
        %348 = vmatprep.subr.bf16.mxu0 0
        %349 = vmatpush2.bf16.msra.mxu0 0
        %350 = vmatprep.subr.bf16.mxu0 0
        %351 = vmatpush2.bf16.msra.mxu0 0
        %352 = vmatprep.subr.bf16.mxu0 0
        %353 = vmatpush2.bf16.msra.mxu0 0
        %354 = vmatprep.subr.bf16.mxu0 0
        %355 = vmatpush2.bf16.msra.mxu0 0
        %356 = vmatprep.subr.bf16.mxu0 0
        %357 = vmatpush2.bf16.msra.mxu0 0
        %358 = vmatprep.subr.bf16.mxu0 0
        %359 = vmatpush2.bf16.msra.mxu0 0
        %360 = vmatprep.subr.bf16.mxu0 0
        %361 = vmatpush2.bf16.msra.mxu0 0
        %362 = vmatprep.subr.bf16.mxu0 0
        %363 = vmatpush2.bf16.msra.mxu0 0
        %364 = vmatprep.mubr.bf16.mxu0 0
        %365 = vmatmul.mubr.bf16.gmra.mxu0 %v331
        %v366 = vpop.f32.mrf.mxu0
        %v367 = vadd.f32 0.0, %v366
        %v368 = vpop.f32.mrf.mxu0
        %v369 = vpop.f32.mrf.mxu0
        %v370 = vpop.f32.mrf.mxu0
        %371 = vdwg.mxu0
        %s372 = smul.u32 %s22, 128
        %v373 = vlaneseq
        %v374 = vand.u32 %v373, 127
        %v375 = vstv %s372
        %v376 = vadd.s32 %v375, %v374
        %v377 = vld [vmem:[%s229] sm:$0xff]
        %378 = vset.pattern.permute.xlu0 0
        %379 = vperm.xlu0 %378, %v377
        %v380 = vpop.permute.xlu0 %379
        %vm381 = vcmp.eq.s32.totalorder %v376, %v380
        %vm382 = vcmp.lt.s32.totalorder %v376, 300
        %v383 = vmul.f32 %v367, 64.0
        %v384 = vsub.f32 %v383, 22.4
        %v385 = vsel %vm381, %v384, %v383
        %v386 = vsel %vm382, %v385, -1e+30
        %387 = vmax.xlane.f32.xlu0 %v386
        %v388 = vpop.xlane.xlu0 %387
        %v389 = vld [vmem:[#allocation3] sm:$0xff]
        %v390 = vmax.f32 %v389, %v388
        %v391 = vsub.f32 %v389, %v390
        %v392 = vmul.f32 %v391, 1.442695
        %v393 = vpow.pop %v392
        %395 = vset.pattern.permute.xlu0 0
        %396 = vperm.xlu0 %395, %v390
        %v397 = vpop.permute.xlu0 %396
        %v399 = vsub.f32 %v386, %v397
        %v400 = vmul.f32 %v399, 1.442695
        %v401 = vpow.pop %v400
        %402 = vadd.xlane.f32.xlu0 %v401
        %v403 = vpop.xlane.xlu0 %402
        %v404 = vld [vmem:[#allocation4] sm:$0xff]
        %v405 = vmul.f32 %v393, %v404
        %v406 = vadd.f32 %v405, %v403
        %vm407 = vcmask 7168
        %408 = vst.msk [vmem:[#allocation4] sm:$0xff] %vm407, %v406
        %409 = vst.msk [vmem:[#allocation3] sm:$0xff] %vm407, %v390
        %v410 = vld [vmem:[#allocation5] sm:$0xff]
        %v411 = vsel %vm381, %v386, 0.0
        %412 = vadd.xlane.f32.xlu0 %v411
        %v413 = vpop.xlane.xlu0 %412
        %v414 = vadd.f32 %v410, %v413
        %415 = vst.msk [vmem:[#allocation5] sm:$0xff] %vm407, %v414
        %p416 = scmp.eq.s32.totalorder %s22, 2
        // Predicated region
        $region41: #{tpu_custom_call.1} parent=31 // pred_check
          %p417 = pneg %p416
        $region42: #{tpu_custom_call.1} parent=31 // pred_check_branch
          %419 = sbr.rel (%p417) target = $region44
        $region43: #{tpu_custom_call.1} parent=31 // pred_region
          %s420 = smul.u32 %s21, 8
          %v421 = vlaneseq
          %v422 = vshrl.u32 %v421, 7
          %v423 = vstv %s420
          %v424 = vadd.s32 %v423, %v422
          %vm425 = vcmp.lt.s32.totalorder %v424, 12
          %v426 = vld [vmem:[#allocation3] sm:$0xff]
          %v427 = vld [vmem:[#allocation4] sm:$0xff]
          %v428 = vlog2.pop %v427
          %v429 = vmul.f32 %v428, 0.6931472
          %v430 = vadd.f32 %v426, %v429
          %v431 = vld [vmem:[#allocation5] sm:$0xff]
          %v432 = vsub.f32 %v430, %v431
          %v433 = vsel %vm425, %v432, 0.0
          %434 = vst.msk [vmem:[%s233] sm:$0xff] %vm407, %v433
        $region44: #{tpu_custom_call.1} parent=31 // pred_fallthru
          _
        %p435 = scmp.lt.s32.totalorder %s21, 1
        %s436 = scalar_select %p435, %s21, 1
        %s437 = smul.addr %s436, 8
        %s438 = scalar_lea.vmem %s3, %s437
        // Predicated region
        $region45: #{tpu_custom_call.1} parent=31 // pred_check
          %p439 = pneg %p125
        $region46: #{tpu_custom_call.1} parent=31 // pred_check_branch
          %441 = sbr.rel (%p439) target = $region48
        $region47: #{tpu_custom_call.1} parent=31 // pred_region
          _
        $region48: #{tpu_custom_call.1} parent=31 // pred_fallthru
          _
      $region32: #{tpu_custom_call.1} parent=5 // pred_fallthru
        _
      %p442 = scmp.le.s32.totalorder 2, %s12
      // Predicated region
      $region49: #{tpu_custom_call.1} parent=5 // pred_check
        %p443 = pneg %p442
      $region50: #{tpu_custom_call.1} parent=5 // pred_check_branch
        %445 = sbr.rel (%p443) target = $region52
      $region51: #{tpu_custom_call.1} parent=5 // pred_region
        %s446 = ssub.s32 %s12, 2
        // Predicated region
        $region53: #{tpu_custom_call.1} parent=51 // pred_check
          %p447 = pneg %p131
        $region54: #{tpu_custom_call.1} parent=51 // pred_check_branch
          %449 = sbr.rel (%p447) target = $region56
        $region55: #{tpu_custom_call.1} parent=51 // pred_region
          %p450 = scmp.lt.s32.totalorder %s23, 1
          %s451 = scalar_select %p450, %s23, 1
          %s452 = smul.addr %s451, 8
          %s453 = scalar_lea.vmem %s3, %s452
        $region56: #{tpu_custom_call.1} parent=51 // pred_fallthru
          _
      $region52: #{tpu_custom_call.1} parent=5 // pred_fallthru
        _
    $region6: #{tpu_custom_call.1} parent=1 // loop_footer
      %s16 = sadd.s32 1, %s12
    $region7: #{tpu_custom_call.1} parent=1 // loop_footer_branch
      %11 = sbr.rel target = $region3
    $region8: #{tpu_custom_call.1} parent=1 // loop_exit
      _
    %454 = vsyncpa [#allocation7], 1
    %s455 = scalar_lea.sflag [#allocation7], 1
    %456 = vsyncpa %s455, 1

</llo_original>
